<compile_context>
chip_gen: v6e
topology: v6e:2x2x1
jax: 0.10.0
libtpu: 0.0.40
codegen_flags: <defaults>
</compile_context>

<pallas_src>
import functools

import jax
import jax.numpy as jnp
from jax.experimental import pallas as pl
from jax.experimental.pallas import tpu as pltpu

_LANE = 128
_SUBLANE = 8


def _focal_loss_kernel(logits_ref, target_ref, partial_ref, *,
                       alpha, gamma, n_rows, block_rows):
    pid = pl.program_id(0)

    logits = logits_ref[...].astype(jnp.float32)               # (TN, C)
    tgt = target_ref[...]                                       # (TN, 1) int32

    # Validity mask for padded tail rows of the last block.  All math below is
    # row-local, so garbage in padded rows cannot leak into valid rows; the
    # final select (not multiply) removes it from the reduction, so no
    # pre-scrub of the logits is needed.
    row_in_blk = jax.lax.broadcasted_iota(jnp.int32, (logits.shape[0], 1), 0)
    valid = pid * block_rows + row_in_blk < n_rows               # (TN, 1)

    # Numerically-stable log-softmax pieces: one exp per element, one log/row.
    row_max = jnp.max(logits, axis=-1, keepdims=True)            # (TN, 1)
    shifted = logits - row_max                                    # (TN, C)
    sum_exp = jnp.sum(jnp.exp(shifted), axis=-1, keepdims=True)   # (TN, 1)

    # One-hot gather of the target logit (VPU compare + select, XLU reduce).
    class_ids = jax.lax.broadcasted_iota(jnp.int32, logits.shape, 1)
    tgt_shifted = jnp.sum(jnp.where(class_ids == tgt, shifted, 0.0),
                          axis=-1, keepdims=True)                 # (TN, 1)

    ce = jnp.log(sum_exp) - tgt_shifted                           # (TN, 1)
    # p_t = exp(-ce): one extra per-row exp on the otherwise-idle EUP slot
    # instead of a second (TN, C) multiply + cross-lane reduce.
    p_t = jnp.exp(-ce)                                            # (TN, 1)

    # Clamp: fp rounding can make p_t slightly exceed 1 when the target class
    # dominates; a negative base would NaN the non-integer-gamma pow path.
    one_minus_pt = jnp.maximum(1.0 - p_t, 0.0)
    if isinstance(gamma, int) and gamma >= 0:
        w = jnp.ones_like(one_minus_pt)
        for _ in range(gamma):                                    # VPU multiplies
            w = w * one_minus_pt
    else:
        w = one_minus_pt ** gamma

    focal = alpha * w * ce                                        # (TN, 1)
    focal = jnp.where(valid, focal, 0.0)                          # mask padded rows

    # One partial sum per grid block, written to a lane-dense (8,128) tile
    # (unmasked store, 4 KiB writeback); reduced outside the kernel.
    partial = jnp.sum(focal)
    partial_ref[...] = jnp.broadcast_to(partial, partial_ref.shape)


def _padded_lanes(c):
    return ((c + _LANE - 1) // _LANE) * _LANE


def _vmem_bytes_per_row(c, itemsize):
    """Honest per-row VMEM footprint of the streaming pipeline."""
    pc = _padded_lanes(c)
    logits_in = 2 * pc * itemsize            # double-buffered logits tile (lane-padded)
    target_in = 2 * _LANE * 4                # (rows,1) int32 pads lane dim 1 -> 128, x2 bufs
    f32_copy = pc * 4 if itemsize < 4 else 0  # in-kernel f32 upcast copy for bf16/fp8 inputs
    temporaries = 3 * pc * 4                 # ~3 live (rows, C) f32/i32 temps (shifted, exp, iota)
    return logits_in + target_in + f32_copy + temporaries


def _pick_block_rows(n, c, itemsize, vmem_budget_bytes=24 * 1024 * 1024):
    """Largest row tile (multiple of 8) whose pipeline footprint fits budget."""
    per_row = _vmem_bytes_per_row(c, itemsize)
    rows = max(_SUBLANE, vmem_budget_bytes // per_row)
    rows = max(_SUBLANE, (rows // _SUBLANE) * _SUBLANE)
    if rows >= n:
        return n          # single block covering the whole batch (always legal)
    return rows           # multiple of 8 -> legal sublane tiling


def focal_loss(logits, target, alpha=0.5, gamma=2, reduction="mean",
               block_rows=None):
    """Pallas TPU implementation of FocalLoss.forward ('mean' / 'sum')."""
    # TODO(synk): reduction='none' (per-sample vector output) not implemented.
    assert reduction in ("mean", "sum"), "only 'mean'/'sum' implemented"
    n, c = logits.shape
    itemsize = jnp.dtype(logits.dtype).itemsize   # bf16 inputs stream at 2 B/elem
    target2d = target.astype(jnp.int32).reshape(n, 1)

    if block_rows is None:
        block_rows = _pick_block_rows(n, c, itemsize)
    block_rows = int(block_rows)
    if block_rows >= n:
        block_rows = n
    else:
        block_rows = max(_SUBLANE, (block_rows // _SUBLANE) * _SUBLANE)
    num_blocks = (n + block_rows - 1) // block_rows

    # Scoped-VMEM limit sized from the real footprint (+25% headroom); covers
    # v5e's 16 MiB default and stays well inside v7x's 64 MiB physical VMEM.
    footprint = _vmem_bytes_per_row(c, itemsize) * block_rows
    vmem_limit = int(min(48 * 1024 * 1024,
                         max(16 * 1024 * 1024, footprint * 5 // 4 + (1 << 20))))

    kernel = functools.partial(
        _focal_loss_kernel,
        alpha=float(alpha), gamma=gamma, n_rows=n, block_rows=block_rows,
    )

    cost = pl.CostEstimate(
        flops=7 * n * c,
        transcendentals=n * c + 2 * n,
        bytes_accessed=n * c * itemsize + n * 4 + num_blocks * _SUBLANE * _LANE * 4,
    )

    partials = pl.pallas_call(
        kernel,
        out_shape=jax.ShapeDtypeStruct((num_blocks, _SUBLANE, _LANE), jnp.float32),
        grid=(num_blocks,),
        in_specs=[
            pl.BlockSpec((block_rows, c), lambda i: (i, 0)),   # logits tile
            pl.BlockSpec((block_rows, 1), lambda i: (i, 0)),   # target tile
        ],
        out_specs=pl.BlockSpec((1, _SUBLANE, _LANE), lambda i: (i, 0, 0)),
        compiler_params=pltpu.CompilerParams(
            dimension_semantics=("parallel",),   # splits across both TCs on v7x
            vmem_limit_bytes=vmem_limit,
        ),
        cost_estimate=cost,
    )(logits, target2d)

    loss = jnp.sum(partials[:, 0, 0])
    if reduction == "mean":
        loss = loss / n
    return loss


def _focal_loss_ref(logits, target, alpha=0.5, gamma=2):
    # Pure-JAX reference for sanity checking (reduction='mean').
    logits = logits.astype(jnp.float32)
    lse = jax.nn.logsumexp(logits, axis=-1)
    tgt_logit = jnp.take_along_axis(logits, target[:, None], axis=-1)[:, 0]
    ce = lse - tgt_logit
    p_t = jnp.exp(-ce)
    return jnp.mean(alpha * (1.0 - p_t) ** gamma * ce)


if __name__ == "__main__":
    key = jax.random.PRNGKey(0)
    k_logits, k_target = jax.random.split(key)

    # Small shapes; N deliberately NOT a multiple of the row tile so the
    # multi-step grid + tail-row masking path is exercised (grid = 3, last
    # block has 4 padded rows).
    N, C = 20, 32
    logits = jax.random.normal(k_logits, (N, C), dtype=jnp.float32)
    target = jax.random.randint(k_target, (N,), 0, C, dtype=jnp.int32)

    out = focal_loss(logits, target, alpha=0.5, gamma=2, reduction="mean",
                     block_rows=8)
    out = jax.block_until_ready(out)

    ref = _focal_loss_ref(logits, target, alpha=0.5, gamma=2)
    # Math is exact (no approx reciprocal); only ordering differences remain.
    assert jnp.allclose(out, ref, rtol=1e-5, atol=1e-5), (out, ref)

    print("KERNEL_OK")
</pallas_src>

<mosaic_0001>
module attributes {stable_mosaic.version = 11 : i64} {
  func.func @_focal_loss_kernel(%arg0: i32, %arg1: memref<8x32xf32, #tpu.memory_space<vmem>>, %arg2: memref<8x1xi32, #tpu.memory_space<vmem>>, %arg3: memref<1x8x128xf32, #tpu.memory_space<vmem>>) attributes {dimension_semantics = [#tpu.dimension_semantics<parallel>], iteration_bounds = array<i64: 3>, scalar_prefetch = 0 : i64, scratch_operands = 0 : i64, tpu.core_type = #tpu.core_type<tc>, window_params = [{transform_indices = @transform_0, window_bounds = array<i64: 8, 32>}, {transform_indices = @transform_1, window_bounds = array<i64: 8, 1>}, {transform_indices = @transform_2, window_bounds = array<i64: 1, 8, 128>}]} {
    %c0 = arith.constant 0 : index
    %c0_0 = arith.constant 0 : index
    %0 = vector.load %arg1[%c0, %c0_0] : memref<8x32xf32, #tpu.memory_space<vmem>>, vector<8x32xf32>
    %c0_1 = arith.constant 0 : index
    %c0_2 = arith.constant 0 : index
    %1 = vector.load %arg2[%c0_1, %c0_2] : memref<8x1xi32, #tpu.memory_space<vmem>>, vector<8x1xi32>
    %2 = tpu.iota {dimensions = array<i32: 0>} : vector<8x1xi32>
    %c8_i32 = arith.constant 8 : i32
    %3 = arith.muli %arg0, %c8_i32 : i32
    %4 = vector.broadcast %3 : i32 to vector<8x1xi32>
    %5 = arith.addi %4, %2 : vector<8x1xi32>
    %c20_i32 = arith.constant 20 : i32
    %6 = vector.broadcast %c20_i32 : i32 to vector<8x1xi32>
    %7 = arith.cmpi slt, %5, %6 : vector<8x1xi32>
    %cst = arith.constant dense<0xFF800000> : vector<8xf32>
    %8 = vector.multi_reduction <maximumf>, %0, %cst [1] : vector<8x32xf32> to vector<8xf32>
    %9 = vector.shape_cast %8 : vector<8xf32> to vector<8x1xf32>
    %10 = vector.broadcast %9 : vector<8x1xf32> to vector<8x32xf32>
    %11 = arith.subf %0, %10 : vector<8x32xf32>
    %12 = math.exp %11 : vector<8x32xf32>
    %cst_3 = arith.constant dense<0.000000e+00> : vector<8xf32>
    %13 = vector.multi_reduction <add>, %12, %cst_3 [1] : vector<8x32xf32> to vector<8xf32>
    %14 = vector.shape_cast %13 : vector<8xf32> to vector<8x1xf32>
    %15 = tpu.iota {dimensions = array<i32: 1>} : vector<8x32xi32>
    %16 = vector.broadcast %1 : vector<8x1xi32> to vector<8x32xi32>
    %17 = arith.cmpi eq, %15, %16 : vector<8x32xi32>
    %cst_4 = arith.constant 0.000000e+00 : f32
    %18 = vector.broadcast %cst_4 : f32 to vector<8x32xf32>
    %19 = arith.select %17, %11, %18 : vector<8x32xi1>, vector<8x32xf32>
    %cst_5 = arith.constant dense<0.000000e+00> : vector<8xf32>
    %20 = vector.multi_reduction <add>, %19, %cst_5 [1] : vector<8x32xf32> to vector<8xf32>
    %21 = vector.shape_cast %20 : vector<8xf32> to vector<8x1xf32>
    %22 = math.log %14 : vector<8x1xf32>
    %23 = arith.subf %22, %21 : vector<8x1xf32>
    %cst_6 = arith.constant 0.000000e+00 : f32
    %24 = vector.broadcast %cst_6 : f32 to vector<8x1xf32>
    %25 = arith.subf %24, %23 : vector<8x1xf32>
    %26 = math.exp %25 : vector<8x1xf32>
    %cst_7 = arith.constant 1.000000e+00 : f32
    %27 = vector.broadcast %cst_7 : f32 to vector<8x1xf32>
    %28 = arith.subf %27, %26 : vector<8x1xf32>
    %cst_8 = arith.constant 0.000000e+00 : f32
    %29 = vector.broadcast %cst_8 : f32 to vector<8x1xf32>
    %30 = arith.maximumf %28, %29 : vector<8x1xf32>
    %cst_9 = arith.constant 1.000000e+00 : f32
    %31 = vector.broadcast %cst_9 : f32 to vector<8x1xf32>
    %32 = arith.mulf %31, %30 : vector<8x1xf32>
    %33 = arith.mulf %32, %30 : vector<8x1xf32>
    %cst_10 = arith.constant 5.000000e-01 : f32
    %34 = vector.broadcast %cst_10 : f32 to vector<8x1xf32>
    %35 = arith.mulf %34, %33 : vector<8x1xf32>
    %36 = arith.mulf %35, %23 : vector<8x1xf32>
    %cst_11 = arith.constant 0.000000e+00 : f32
    %37 = vector.broadcast %cst_11 : f32 to vector<8x1xf32>
    %38 = arith.select %7, %36, %37 : vector<8x1xi1>, vector<8x1xf32>
    %39 = vector.shape_cast %38 : vector<8x1xf32> to vector<1x8x1xf32>
    %cst_12 = arith.constant dense<0.000000e+00> : vector<1xf32>
    %40 = vector.multi_reduction <add>, %39, %cst_12 [1, 2] : vector<1x8x1xf32> to vector<1xf32>
    %41 = vector.shape_cast %40 : vector<1xf32> to vector<1x1x1xf32>
    %42 = vector.extract %41[0, 0, 0] : f32 from vector<1x1x1xf32>
    %43 = vector.broadcast %42 : f32 to vector<1x8x128xf32>
    %c0_13 = arith.constant 0 : index
    %c0_14 = arith.constant 0 : index
    %c0_15 = arith.constant 0 : index
    %44 = vector.load %arg3[%c0_13, %c0_14, %c0_15] : memref<1x8x128xf32, #tpu.memory_space<vmem>>, vector<1x8x128xf32>
    tpu.vector_store %arg3[%c0_13, %c0_14, %c0_15], %43 {strides = array<i32>} : memref<1x8x128xf32, #tpu.memory_space<vmem>>, vector<1x8x128xf32>,
    return
  }
  func.func @transform_0(%arg0: i32) -> (i32, i32) {
    %c0_i32 = arith.constant 0 : i32
    %c0_i32_0 = arith.constant 0 : i32
    return %arg0, %c0_i32 : i32, i32
  }
  func.func @transform_1(%arg0: i32) -> (i32, i32) {
    %c0_i32 = arith.constant 0 : i32
    %c0_i32_0 = arith.constant 0 : i32
    return %arg0, %c0_i32 : i32, i32
  }
  func.func @transform_2(%arg0: i32) -> (i32, i32, i32) {
    %c0_i32 = arith.constant 0 : i32
    %c0_i32_0 = arith.constant 0 : i32
    %c0_i32_1 = arith.constant 0 : i32
    return %arg0, %c0_i32, %c0_i32_0 : i32, i32, i32
  }
}

</mosaic_0001>

<llo_original>
// kernel: tpu_custom_call.1
$region0: #{tpu_custom_call.1}
  #allocation0 [shape = 'u32[]', space=smem, size = 0x4, offset = 0x4, fixed_abs, tag = 'smem constant byte address 0x4 - core index']
  #allocation1 [shape = 'u32[144,128]{1,0:T(1,128)}', space=vmem, size = 0x12000, scoped, tag = 'internal scratch']
  %s0 = inlined_call_operand.vmem [shape: f32[20,32], index: 0, kind: input, shape index: {}]
  %s1 = inlined_call_operand.vmem [shape: s32[20,1], index: 1, kind: input, shape index: {}]
  %s2 = inlined_call_operand.hbm [shape: f32[3,8,128], index: 2, kind: output, shape index: {}]
  %s3 = sld [smem:[#allocation0]]
  $region41: #{tpu_custom_call.1} parent=0
    _
  %s5 = ssub.s32 1, %s3
  %s6 = scalar_select 0, %s5, %s3
  $region1: #{tpu_custom_call.1} parent=0
    #allocation2 [shape = 'u8[8192]{0}', space=vmem, size = 0x2000, scoped, tag = 'output window, operand 0']
    #allocation3 [shape = 's32[2]{0}', space=sflag, size = 0x8, scoped, tag = 'scoped memory for tpu_custom_call.1']
    %7 = vsyncpa [#allocation3], 0
    %s8 = scalar_lea.sflag [#allocation3], 1
    %9 = vsyncpa %s8, 0
    loop: start=0, step=1, limit=5
    $region2: #{tpu_custom_call.1} parent=1 // loop_pre_header
      _
    $region3: #{tpu_custom_call.1} parent=1 // loop_header
      %s11 = sphi 0, %s15
      %p12 = scmp.ge.s32.totalorder %s11, 5
      %s21 = sphi 0, %s23
      %s24 = sphi 0, %s21
      %s25 = sphi 0, %s24
      %s41 = sphi 0, %s25
      %s47 = sphi 0, %s49
      %s50 = sphi 0, %s47
      %s51 = sphi 0, %s50
      %s67 = sphi 0, %s51
      %s73 = sphi 0, %s75
      %s76 = sphi 0, %s73
      %s77 = sphi 0, %s76
      %s93 = sphi 0, %s77
    $region4: #{tpu_custom_call.1} parent=1 // loop_header_branch
      %14 = sbr.rel (%p12) target = $region8
    $region5: #{tpu_custom_call.1} parent=1 // loop_body
      %s16 = ssub.s32 %s11, 1
      %s17 = ssub.s32 %s11, 2
      %s18 = sadd.s32 %s11, 1
      %s19 = ssub.s32 %s11, %s18
      %p20 = scmp.eq.s32.totalorder %s19, 0
      %s22 = sadd.s32 %s21, 1
      %s23 = scalar_select %p20, %s21, %s22
      %p26 = pneg %p20
      %p27 = scmp.eq.s32.totalorder %s11, 2
      %p28 = por %p26, %p27
      %p29 = scmp.ne.s32.totalorder %s21, %s24
      %p30 = scmp.eq.s32.totalorder %s11, 0
      %p31 = por %p29, %p30
      %p32 = scmp.ne.s32.totalorder %s21, %s24
      %p33 = scmp.eq.s32.totalorder %s16, 2
      %p34 = por %p32, %p33
      %p35 = scmp.ne.s32.totalorder %s24, %s25
      %p36 = scmp.eq.s32.totalorder %s16, 0
      %p37 = por %p35, %p36
      %p38 = scmp.ne.s32.totalorder %s24, %s25
      %p39 = scmp.eq.s32.totalorder %s17, 2
      %p40 = por %p38, %p39
      %p42 = scmp.ne.s32.totalorder %s25, %s41
      %p43 = scmp.eq.s32.totalorder %s17, 0
      %p44 = por %p42, %p43
      %s45 = ssub.s32 %s11, %s18
      %p46 = scmp.eq.s32.totalorder %s45, 0
      %s48 = sadd.s32 %s47, 1
      %s49 = scalar_select %p46, %s47, %s48
      %p52 = pneg %p46
      %p53 = scmp.eq.s32.totalorder %s11, 2
      %p54 = por %p52, %p53
      %p55 = scmp.ne.s32.totalorder %s47, %s50
      %p56 = scmp.eq.s32.totalorder %s11, 0
      %p57 = por %p55, %p56
      %p58 = scmp.ne.s32.totalorder %s47, %s50
      %p59 = scmp.eq.s32.totalorder %s16, 2
      %p60 = por %p58, %p59
      %p61 = scmp.ne.s32.totalorder %s50, %s51
      %p62 = scmp.eq.s32.totalorder %s16, 0
      %p63 = por %p61, %p62
      %p64 = scmp.ne.s32.totalorder %s50, %s51
      %p65 = scmp.eq.s32.totalorder %s17, 2
      %p66 = por %p64, %p65
      %p68 = scmp.ne.s32.totalorder %s51, %s67
      %p69 = scmp.eq.s32.totalorder %s17, 0
      %p70 = por %p68, %p69
      %s71 = ssub.s32 %s11, %s18
      %p72 = scmp.eq.s32.totalorder %s71, 0
      %s74 = sadd.s32 %s73, 1
      %s75 = scalar_select %p72, %s73, %s74
      %p78 = pneg %p72
      %p79 = scmp.eq.s32.totalorder %s11, 2
      %p80 = por %p78, %p79
      %p81 = scmp.ne.s32.totalorder %s73, %s76
      %p82 = scmp.eq.s32.totalorder %s11, 0
      %p83 = por %p81, %p82
      %p84 = scmp.ne.s32.totalorder %s73, %s76
      %p85 = scmp.eq.s32.totalorder %s16, 2
      %p86 = por %p84, %p85
      %p87 = scmp.ne.s32.totalorder %s76, %s77
      %p88 = scmp.eq.s32.totalorder %s16, 0
      %p89 = por %p87, %p88
      %p90 = scmp.ne.s32.totalorder %s76, %s77
      %p91 = scmp.eq.s32.totalorder %s17, 2
      %p92 = por %p90, %p91
      %p94 = scmp.ne.s32.totalorder %s77, %s93
      %p95 = scmp.eq.s32.totalorder %s17, 0
      %p96 = por %p94, %p95
      %p97 = scmp.le.s32.totalorder 1, %s11
      %p98 = scmp.lt.s32.totalorder %s11, 4
      %p99 = pnand %p97, %p98
      %p100 = pneg %p99
      // Predicated region
      $region9: #{tpu_custom_call.1} parent=5 // pred_check
        _
      $region10: #{tpu_custom_call.1} parent=5 // pred_check_branch
        %102 = sbr.rel (%p99) target = $region12
      $region11: #{tpu_custom_call.1} parent=5 // pred_region
        %s103 = ssub.s32 %s11, 1
      $region12: #{tpu_custom_call.1} parent=5 // pred_fallthru
        _
      %p104 = scmp.lt.s32.totalorder %s11, 3
      // Predicated region
      $region13: #{tpu_custom_call.1} parent=5 // pred_check
        %p105 = pneg %p104
      $region14: #{tpu_custom_call.1} parent=5 // pred_check_branch
        %107 = sbr.rel (%p105) target = $region16
      $region15: #{tpu_custom_call.1} parent=5 // pred_region
        // Predicated region
        $region17: #{tpu_custom_call.1} parent=15 // pred_check
          %p108 = pneg %p31
        $region18: #{tpu_custom_call.1} parent=15 // pred_check_branch
          %110 = sbr.rel (%p108) target = $region20
        $region19: #{tpu_custom_call.1} parent=15 // pred_region
          %p111 = scmp.lt.s32.totalorder %s11, 2
          %s112 = scalar_select %p111, %s11, 2
          %s113 = smul.addr %s112, 8
          %s114 = scalar_lea.vmem %s0, %s113
        $region20: #{tpu_custom_call.1} parent=15 // pred_fallthru
          _
        // Predicated region
        $region21: #{tpu_custom_call.1} parent=15 // pred_check
          %p115 = pneg %p57
        $region22: #{tpu_custom_call.1} parent=15 // pred_check_branch
          %117 = sbr.rel (%p115) target = $region24
        $region23: #{tpu_custom_call.1} parent=15 // pred_region
          %p118 = scmp.lt.s32.totalorder %s11, 2
          %s119 = scalar_select %p118, %s11, 2
          %s120 = smul.addr %s119, 8
          %s121 = scalar_lea.vmem %s1, %s120
        $region24: #{tpu_custom_call.1} parent=15 // pred_fallthru
          _
      $region16: #{tpu_custom_call.1} parent=5 // pred_fallthru
        _
      %p122 = scmp.le.s32.totalorder 1, %s11
      %p123 = scmp.lt.s32.totalorder %s11, 4
      %p124 = pnand %p122, %p123
      %p125 = pneg %p124
      // Predicated region
      $region25: #{tpu_custom_call.1} parent=5 // pred_check
        _
      $region26: #{tpu_custom_call.1} parent=5 // pred_check_branch
        %127 = sbr.rel (%p124) target = $region28
      $region27: #{tpu_custom_call.1} parent=5 // pred_region
        %s128 = ssub.s32 %s11, 1
        %p129 = scmp.lt.s32.totalorder %s16, 2
        %s130 = scalar_select %p129, %s16, 2
        %s131 = smul.addr %s130, 8
        %s132 = scalar_lea.vmem %s0, %s131
        %p133 = pneg %p37
        %p134 = pneg %p34
        %p135 = scmp.lt.s32.totalorder %s16, 2
        %s136 = scalar_select %p135, %s16, 2
        %s137 = smul.addr %s136, 8
        %s138 = scalar_lea.vmem %s1, %s137
        %p139 = pneg %p63
        %p140 = pneg %p60
        %p141 = pneg %p89
        %p142 = pneg %p86
        %s143 = sand.u32 %s76, 1
        %s144 = scalar_lea.sflag [#allocation3], %s143
        %s145 = sand.u32 %s76, 1
        %s146 = smul.addr %s145, 8
        %s147 = scalar_lea.vmem [#allocation2], %s146
        %p148 = scmp.lt.s32.totalorder %s16, 2
        %s149 = scalar_select %p148, %s16, 2
        %s150 = smul.addr %s149, 8
        %s151 = scalar_lea.vmem %s0, %s150
        %p152 = scmp.lt.s32.totalorder %s16, 2
        %s153 = scalar_select %p152, %s16, 2
        %s154 = smul.addr %s153, 8
        %s155 = scalar_lea.vmem %s1, %s154
        %v156 = vld [vmem:[%s151] sm:$0xff]
        %v157 = vld [vmem:[%s155] sm:$0xff]
        %v158 = vlaneseq
        %v159 = vshrl.u32 %v158, 7
        %s160 = smul.u32 %s16, 8
        %v161 = vstv %s160
        %v162 = vadd.s32 %v161, %v159
        %vm163 = vcmp.lt.s32.totalorder %v162, 20
        %vm164 = vcmask 261120
        %v165 = vsel %vm164, %v156, -inf
        %166 = vmax.xlane.f32.xlu0 %v165
        %v167 = vpop.xlane.xlu0 %166
        %v168 = vsub.f32 %v156, %v167
        %v169 = vmul.f32 %v168, 1.442695
        %v170 = vpow.pop %v169
        %v171 = vsel %vm164, %v170, 0.0
        %172 = vadd.xlane.f32.xlu0 %v171
        %v173 = vpop.xlane.xlu0 %172
        %v174 = vlaneseq
        %v175 = vand.u32 %v174, 127
        %176 = vset.pattern.permute.xlu0 0
        %177 = vperm.xlu0 %176, %v157
        %v178 = vpop.permute.xlu0 %177
        %vm179 = vcmp.eq.s32.totalorder %v175, %v178
        %v180 = vsel %vm179, %v168, 0.0
        %v181 = vsel %vm164, %v180, 0.0
        %182 = vadd.xlane.f32.xlu0 %v181
        %v183 = vpop.xlane.xlu0 %182
        %v184 = vlog2.pop %v173
        %v185 = vmul.f32 %v184, 0.6931472
        %v186 = vsub.f32 %v185, %v183
        %v187 = vsub.f32 0.0, %v186
        %v188 = vmul.f32 %v187, 1.442695
        %v189 = vpow.pop %v188
        %v190 = vsub.f32 1.0, %v189
        %v191 = vmax.f32 %v190, 0.0
        %v192 = vmul.f32 %v191, %v191
        %v193 = vmul.f32 %v192, 0.5
        %v194 = vmul.f32 %v193, %v186
        %v195 = vsel %vm163, %v194, 0.0
        %vm196 = vcmask 7168
        %v197 = vsel %vm196, %v195, 0.0
        %198 = vadd.xlane.f32.xlu0 %v197
        %v199 = vpop.xlane.xlu0 %198
        %v200 = vrot.slane %v199, 4
        %v201 = vadd.f32 %v199, %v200
        %v202 = vrot.slane %v201, 2
        %v203 = vadd.f32 %v201, %v202
        %v204 = vrot.slane %v203, 1
        %v205 = vadd.f32 %v203, %v204
        %s206 = vtos %v205
        %v207 = vstv %s206
        %208 = vst [vmem:[%s147] sm:$0xff] %v207
        %s209 = sand.u32 %s76, 1
        %s210 = scalar_lea.sflag [#allocation3], %s209
        %s211 = sand.u32 %s76, 1
        %s212 = smul.addr %s211, 8
        %s213 = scalar_lea.vmem [#allocation2], %s212
        // Predicated region
        $region29: #{tpu_custom_call.1} parent=27 // pred_check
          %p214 = pneg %p86
        $region30: #{tpu_custom_call.1} parent=27 // pred_check_branch
          %216 = sbr.rel (%p214) target = $region32
        $region31: #{tpu_custom_call.1} parent=27 // pred_region
          %s218 = ssub.s32 128, 128
          %219 = vsyncadd %s210, %s218
          %s220 = smul.addr %s16, 128
          %s221 = scalar_lea.hbm %s2, %s220
          %s223 = sshll.u32 %s213, 4
          %s224 = int_to_ptr.vmem [resolvable:$true] %s223
          %226 = dma.vmem_to_hbm [thread:$0]  %s224, 128, %s221, %s210
        $region32: #{tpu_custom_call.1} parent=27 // pred_fallthru
          _
      $region28: #{tpu_custom_call.1} parent=5 // pred_fallthru
        _
      %p227 = scmp.le.s32.totalorder 2, %s11
      // Predicated region
      $region33: #{tpu_custom_call.1} parent=5 // pred_check
        %p228 = pneg %p227
      $region34: #{tpu_custom_call.1} parent=5 // pred_check_branch
        %230 = sbr.rel (%p228) target = $region36
      $region35: #{tpu_custom_call.1} parent=5 // pred_region
        %s231 = ssub.s32 %s11, 2
        // Predicated region
        $region37: #{tpu_custom_call.1} parent=35 // pred_check
          %p232 = pneg %p92
        $region38: #{tpu_custom_call.1} parent=35 // pred_check_branch
          %234 = sbr.rel (%p232) target = $region40
        $region39: #{tpu_custom_call.1} parent=35 // pred_region
          %s235 = sand.u32 %s77, 1
          %s236 = scalar_lea.sflag [#allocation3], %s235
          %s237 = sand.u32 %s77, 1
          %s238 = smul.addr %s237, 8
          %s239 = scalar_lea.vmem [#allocation2], %s238
          %240 = dma.done %s236, 128
        $region40: #{tpu_custom_call.1} parent=35 // pred_fallthru
          _
      $region36: #{tpu_custom_call.1} parent=5 // pred_fallthru
        _
    $region6: #{tpu_custom_call.1} parent=1 // loop_footer
      %s15 = sadd.s32 1, %s11
    $region7: #{tpu_custom_call.1} parent=1 // loop_footer_branch
      %10 = sbr.rel target = $region3
    $region8: #{tpu_custom_call.1} parent=1 // loop_exit
      _
    %241 = vsyncpa [#allocation3], 1
    %s242 = scalar_lea.sflag [#allocation3], 1
    %243 = vsyncpa %s242, 1

</llo_original>
